<compile_context>
chip_gen: v6e
topology: v6e:2x2x1
jax: 0.10.0
libtpu: 0.0.40
codegen_flags: <defaults>
</compile_context>

<pallas_src>
import math

import jax
import jax.numpy as jnp
from jax.experimental import pallas as pl
from jax.experimental.pallas import tpu as pltpu

Q1 = 0.1
Q9 = 1.0 - Q1

_LANES = 128
_MAX_ROW_TILE = 2048            # (2048,128) f32 tile = 1 MiB; 3 streams double-buffered = 6 MiB
_VMEM_LIMIT = 32 * 1024 * 1024  # explicit scoped-VMEM limit, safe on v5e/v6e/v7x
_MIN_PALLAS_ELEMS = 16384       # below this, the pure-XLA fusion is strictly faster


def _num_tensorcores():
    """Best-effort TensorCores-per-device count (for megacore grid sharding)."""
    try:
        kind = jax.devices()[0].device_kind.lower()
    except Exception:
        return 1
    if "lite" in kind or "v5e" in kind or "v6e" in kind:
        return 1
    if "v4" in kind or "v5" in kind or "7" in kind:
        # Megacore / dual-TC chips: shard the leading "parallel" axis.
        return 2
    return 1


def _pinball_kernel(o_ref, t_ref, v_ref, acc_ref):
    """Accumulate unweighted sum of (loss_10 + loss_90) per (acc_row, lane)."""

    @pl.when(pl.program_id(1) == 0)
    def _():
        acc_ref[...] = jnp.zeros_like(acc_ref)

    o = o_ref[...].astype(jnp.float32)
    t = t_ref[...].astype(jnp.float32)
    v = v_ref[...].astype(jnp.float32)

    # PinBallLossBase: with q9 == 1 - q1,
    #   loss_10 + loss_90 == max(|t - o|, |v|) - (1 - 2*q1) * v
    e = t - o
    contrib = jnp.maximum(jnp.abs(e), jnp.abs(v)) - (1.0 - 2.0 * Q1) * v

    # Pure-VALU partial reduction: fold the row tile down to the resident
    # (acc_rows, 128) accumulator (acc_rows is a multiple of 8, so this is
    # plain vreg adds). The cross-lane reduce is deferred to the wrapper.
    tr = contrib.shape[0]
    ar = acc_ref.shape[0]
    acc_ref[...] += contrib.reshape(tr // ar, ar, _LANES).sum(axis=0)


def _jnp_forward(output_o, target_o, var_o, w_col):
    """Small-input fast path (identical semantics, single XLA fusion)."""
    o = output_o.astype(jnp.float32)
    t = target_o.astype(jnp.float32)
    v = var_o.astype(jnp.float32)
    q_10 = t - (o - v)
    q_90 = t - (o + v)
    loss_10 = jnp.maximum(Q1 * q_10, (Q1 - 1.0) * q_10)
    loss_90 = jnp.maximum(Q9 * q_90, (Q9 - 1.0) * q_90)
    return jnp.sum((loss_10 + loss_90) * w_col[None, :])


def yaw_pitch_balanced_pinball_loss(output_o, target_o, var_o,
                                    yaw_dim_list, pitch_dim_list,
                                    *, force_pallas=False,
                                    max_row_tile=_MAX_ROW_TILE):
    assert output_o.ndim == 2
    assert output_o.shape == target_o.shape == var_o.shape
    B, D = output_o.shape

    # Same configuration checks as the PyTorch module.
    assert len(set(yaw_dim_list) & set(pitch_dim_list)) == 0
    assert len(set(yaw_dim_list)) == len(yaw_dim_list)
    assert len(set(pitch_dim_list)) == len(pitch_dim_list)
    assert min(min(yaw_dim_list), min(pitch_dim_list)) == 0
    assert max(max(yaw_dim_list), max(pitch_dim_list)) == (
        len(yaw_dim_list) + len(pitch_dim_list) - 1)

    n_yaw = len(yaw_dim_list)
    n_pitch = len(pitch_dim_list)

    # Per-feature weight: collapses the 4 masked means into one weighted sum,
    #   loss = sum_{b,d} (loss_10 + loss_90)[b, d] * w_col[d]
    w_col = jnp.zeros((D,), jnp.float32)
    w_col = w_col.at[jnp.asarray(yaw_dim_list)].set(0.5 / (B * n_yaw))
    w_col = w_col.at[jnp.asarray(pitch_dim_list)].set(0.5 / (B * n_pitch))

    total = B * D
    # Feature index of a flattened lane repeats every `period` 128-lane rows.
    period = D // math.gcd(D, _LANES)
    acc_rows = (period * 8) // math.gcd(period, 8)     # lcm(period, 8)

    # Fast path: tiny inputs, or a pathological D whose period-aligned
    # accumulator would not fit a tile (weights could no longer be folded in
    # after the row reduction).
    if acc_rows > max_row_tile or (not force_pallas and total < _MIN_PALLAS_ELEMS):
        return _jnp_forward(output_o, target_o, var_o, w_col)

    num_cores = _num_tensorcores()
    rows = pl.cdiv(total, _LANES)

    # Row tile: multiple of acc_rows (so the in-kernel fold preserves the
    # lane-phase), as large as possible to amortize the ~0.35us/step overhead,
    # capped so double-buffered inputs stay far under the explicit VMEM limit.
    tile_cap = (max_row_tile // acc_rows) * acc_rows
    tr = min(tile_cap, pl.cdiv(rows, num_cores * acc_rows) * acc_rows)
    tiles_per_core = pl.cdiv(rows, num_cores * tr)
    rows_pad = tiles_per_core * num_cores * tr
    pad = rows_pad * _LANES - total

    def to_lane_dense(x):
        x = x.reshape(-1)
        if pad:
            x = jnp.pad(x, (0, pad))     # pinball(0, 0, 0) == 0 -> exact
        return x.reshape(rows_pad, _LANES)

    o2 = to_lane_dense(output_o)
    t2 = to_lane_dense(target_o)
    v2 = to_lane_dense(var_o)

    data_spec = pl.BlockSpec((tr, _LANES),
                             lambda c, i: (c * tiles_per_core + i, 0))

    itemsize = jnp.dtype(output_o.dtype).itemsize
    cost = pl.CostEstimate(
        flops=6 * rows_pad * _LANES,
        transcendentals=0,
        bytes_accessed=3 * rows_pad * _LANES * itemsize
        + num_cores * acc_rows * _LANES * 4,
    )

    partials = pl.pallas_call(
        _pinball_kernel,
        out_shape=jax.ShapeDtypeStruct((num_cores * acc_rows, _LANES),
                                       jnp.float32),
        grid_spec=pltpu.PrefetchScalarGridSpec(
            num_scalar_prefetch=0,
            grid=(num_cores, tiles_per_core),
            in_specs=[data_spec, data_spec, data_spec],
            out_specs=pl.BlockSpec((acc_rows, _LANES), lambda c, i: (c, 0)),
        ),
        compiler_params=pltpu.CompilerParams(
            # NOTE: on v7x, if "parallel" does not shard across the two
            # TensorCores, switch the leading axis to pltpu.CORE_PARALLEL.
            dimension_semantics=("parallel", "arbitrary"),
            vmem_limit_bytes=_VMEM_LIMIT,
            allow_input_fusion=[True, True, True],
        ),
        cost_estimate=cost,
    )(o2, t2, v2)

    # Fold the per-feature weight into the tiny (num_cores*acc_rows, 128)
    # partials: weight depends only on (acc_row % period, lane) and is the
    # same for every core (tile starts are multiples of `period` rows).
    a_idx = jnp.arange(acc_rows)[:, None] % period
    l_idx = jnp.arange(_LANES)[None, :]
    w2 = w_col[(a_idx * _LANES + l_idx) % D]                 # (acc_rows, 128)
    return jnp.sum(partials.reshape(num_cores, acc_rows, _LANES) * w2[None])


def _reference(output_o, target_o, var_o, yaw_dim_list, pitch_dim_list):
    """Literal jnp port of the PyTorch module (for testing)."""
    q_10 = target_o - (output_o - var_o)
    q_90 = target_o - (output_o + var_o)
    loss_10 = jnp.maximum(Q1 * q_10, (Q1 - 1.0) * q_10)
    loss_90 = jnp.maximum(Q9 * q_90, (Q9 - 1.0) * q_90)
    yaw = jnp.asarray(yaw_dim_list)
    pitch = jnp.asarray(pitch_dim_list)
    l10 = 0.5 * (jnp.mean(loss_10[:, yaw]) + jnp.mean(loss_10[:, pitch]))
    l90 = 0.5 * (jnp.mean(loss_90[:, yaw]) + jnp.mean(loss_90[:, pitch]))
    return l10 + l90


if __name__ == "__main__":
    def make_inputs(key, b, d, dtype=jnp.float32):
        k1, k2, k3 = jax.random.split(key, 3)
        o = jax.random.normal(k1, (b, d), dtype)
        t = jax.random.normal(k2, (b, d), dtype)
        v = jnp.abs(jax.random.normal(k3, (b, d), dtype))
        return o, t, v

    yaw_dims = [0, 1, 2]
    pitch_dims = [3, 4, 5, 6, 7]

    # 1) Small demo shape through the Pallas kernel (single tile).
    o, t, v = make_inputs(jax.random.PRNGKey(0), 4, 8)
    out = yaw_pitch_balanced_pinball_loss(o, t, v, yaw_dims, pitch_dims,
                                          force_pallas=True)
    out = jax.block_until_ready(out)
    ref = _reference(o, t, v, yaw_dims, pitch_dims)
    assert jnp.allclose(out, ref, atol=1e-5, rtol=1e-5), (out, ref)

    # 2) Same shape via the small-input fast path.
    out_fp = jax.block_until_ready(
        yaw_pitch_balanced_pinball_loss(o, t, v, yaw_dims, pitch_dims))
    assert jnp.allclose(out_fp, ref, atol=1e-5, rtol=1e-5), (out_fp, ref)

    # 3) Multi-tile accumulation path (small data, tiny tile forces >1 grid step).
    o, t, v = make_inputs(jax.random.PRNGKey(1), 512, 8)
    out = jax.block_until_ready(
        yaw_pitch_balanced_pinball_loss(o, t, v, yaw_dims, pitch_dims,
                                        force_pallas=True, max_row_tile=8))
    ref = _reference(o, t, v, yaw_dims, pitch_dims)
    assert jnp.allclose(out, ref, atol=1e-4, rtol=1e-4), (out, ref)

    # 4) General D (128 % D != 0) with bf16 inputs (period-aligned accumulator).
    yaw5, pitch5 = [0, 1], [2, 3, 4]
    o, t, v = make_inputs(jax.random.PRNGKey(2), 64, 5, jnp.bfloat16)
    out = jax.block_until_ready(
        yaw_pitch_balanced_pinball_loss(o, t, v, yaw5, pitch5,
                                        force_pallas=True))
    ref = _reference(o.astype(jnp.float32), t.astype(jnp.float32),
                     v.astype(jnp.float32), yaw5, pitch5)
    assert jnp.allclose(out, ref, atol=1e-4, rtol=1e-4), (out, ref)

    print("KERNEL_OK")
</pallas_src>

<mosaic_0001>
module attributes {stable_mosaic.version = 11 : i64} {
  func.func @_pinball_kernel(%arg0: i32, %arg1: i32, %arg2: memref<8x128xf32, #tpu.memory_space<vmem>>, %arg3: memref<8x128xf32, #tpu.memory_space<vmem>>, %arg4: memref<8x128xf32, #tpu.memory_space<vmem>>, %arg5: memref<8x128xf32, #tpu.memory_space<vmem>>) attributes {dimension_semantics = [#tpu.dimension_semantics<parallel>, #tpu.dimension_semantics<arbitrary>], iteration_bounds = array<i64: 1, 1>, scalar_prefetch = 0 : i64, scratch_operands = 0 : i64, tpu.core_type = #tpu.core_type<tc>, window_params = [{transform_indices = @transform_0, window_bounds = array<i64: 8, 128>}, {transform_indices = @transform_1, window_bounds = array<i64: 8, 128>}, {transform_indices = @transform_2, window_bounds = array<i64: 8, 128>}, {transform_indices = @transform_3, window_bounds = array<i64: 8, 128>}]} {
    %c0_i32 = arith.constant 0 : i32
    %0 = arith.cmpi eq, %arg1, %c0_i32 : i32
    %1 = arith.extui %0 : i1 to i32
    %c0_i32_0 = arith.constant 0 : i32
    %2 = arith.cmpi ne, %1, %c0_i32_0 : i32
    scf.if %2 {
      %cst_11 = arith.constant 0.000000e+00 : f32
      %18 = vector.broadcast %cst_11 : f32 to vector<8x128xf32>
      %c0_12 = arith.constant 0 : index
      %c0_13 = arith.constant 0 : index
      %19 = vector.load %arg5[%c0_12, %c0_13] : memref<8x128xf32, #tpu.memory_space<vmem>>, vector<8x128xf32>
      tpu.vector_store %arg5[%c0_12, %c0_13], %18 {strides = array<i32>} : memref<8x128xf32, #tpu.memory_space<vmem>>, vector<8x128xf32>,
    } else {
    }
    %c0 = arith.constant 0 : index
    %c0_1 = arith.constant 0 : index
    %3 = vector.load %arg2[%c0, %c0_1] : memref<8x128xf32, #tpu.memory_space<vmem>>, vector<8x128xf32>
    %c0_2 = arith.constant 0 : index
    %c0_3 = arith.constant 0 : index
    %4 = vector.load %arg3[%c0_2, %c0_3] : memref<8x128xf32, #tpu.memory_space<vmem>>, vector<8x128xf32>
    %c0_4 = arith.constant 0 : index
    %c0_5 = arith.constant 0 : index
    %5 = vector.load %arg4[%c0_4, %c0_5] : memref<8x128xf32, #tpu.memory_space<vmem>>, vector<8x128xf32>
    %6 = arith.subf %4, %3 : vector<8x128xf32>
    %7 = math.absf %6 : vector<8x128xf32>
    %8 = math.absf %5 : vector<8x128xf32>
    %9 = arith.maximumf %7, %8 : vector<8x128xf32>
    %cst = arith.constant 8.000000e-01 : f32
    %10 = vector.broadcast %cst : f32 to vector<8x128xf32>
    %11 = arith.mulf %10, %5 : vector<8x128xf32>
    %12 = arith.subf %9, %11 : vector<8x128xf32>
    %c0_6 = arith.constant 0 : index
    %c0_7 = arith.constant 0 : index
    %13 = vector.load %arg5[%c0_6, %c0_7] : memref<8x128xf32, #tpu.memory_space<vmem>>, vector<8x128xf32>
    %14 = vector.shape_cast %12 : vector<8x128xf32> to vector<1x8x128xf32>
    %cst_8 = arith.constant dense<0.000000e+00> : vector<8x128xf32>
    %15 = vector.multi_reduction <add>, %14, %cst_8 [0] : vector<1x8x128xf32> to vector<8x128xf32>
    %16 = arith.addf %13, %15 : vector<8x128xf32>
    %c0_9 = arith.constant 0 : index
    %c0_10 = arith.constant 0 : index
    %17 = vector.load %arg5[%c0_9, %c0_10] : memref<8x128xf32, #tpu.memory_space<vmem>>, vector<8x128xf32>
    tpu.vector_store %arg5[%c0_9, %c0_10], %16 {strides = array<i32>} : memref<8x128xf32, #tpu.memory_space<vmem>>, vector<8x128xf32>,
    return
  }
  func.func @transform_0(%arg0: i32, %arg1: i32) -> (i32, i32) {
    %c1_i32 = arith.constant 1 : i32
    %0 = arith.muli %arg0, %c1_i32 : i32
    %1 = arith.addi %0, %arg1 : i32
    %c0_i32 = arith.constant 0 : i32
    %c0_i32_0 = arith.constant 0 : i32
    return %1, %c0_i32 : i32, i32
  }
  func.func @transform_1(%arg0: i32, %arg1: i32) -> (i32, i32) {
    %c1_i32 = arith.constant 1 : i32
    %0 = arith.muli %arg0, %c1_i32 : i32
    %1 = arith.addi %0, %arg1 : i32
    %c0_i32 = arith.constant 0 : i32
    %c0_i32_0 = arith.constant 0 : i32
    return %1, %c0_i32 : i32, i32
  }
  func.func @transform_2(%arg0: i32, %arg1: i32) -> (i32, i32) {
    %c1_i32 = arith.constant 1 : i32
    %0 = arith.muli %arg0, %c1_i32 : i32
    %1 = arith.addi %0, %arg1 : i32
    %c0_i32 = arith.constant 0 : i32
    %c0_i32_0 = arith.constant 0 : i32
    return %1, %c0_i32 : i32, i32
  }
  func.func @transform_3(%arg0: i32, %arg1: i32) -> (i32, i32) {
    %c0_i32 = arith.constant 0 : i32
    %c0_i32_0 = arith.constant 0 : i32
    return %arg0, %c0_i32 : i32, i32
  }
}

</mosaic_0001>

<llo_original>
// kernel: tpu_custom_call.1
$region0: #{tpu_custom_call.1}
  #allocation0 [shape = 'u32[]', space=smem, size = 0x4, offset = 0x4, fixed_abs, tag = 'smem constant byte address 0x4 - core index']
  #allocation1 [shape = 'u32[144,128]{1,0:T(1,128)}', space=vmem, size = 0x12000, scoped, tag = 'internal scratch']
  %s0 = inlined_call_operand.hbm [shape: f32[8,128], index: 0, kind: input, shape index: {}]
  %s1 = inlined_call_operand.hbm [shape: f32[8,128], index: 1, kind: input, shape index: {}]
  %s2 = inlined_call_operand.hbm [shape: f32[8,128], index: 2, kind: input, shape index: {}]
  %s3 = inlined_call_operand.hbm [shape: f32[8,128], index: 3, kind: output, shape index: {}]
  %s4 = sld [smem:[#allocation0]]
  $region38: #{tpu_custom_call.1} parent=0
    _
  %s6 = ssub.s32 1, %s4
  %s7 = scalar_select 0, %s6, %s4
  $region1: #{tpu_custom_call.1} parent=0
    #allocation2 [shape = 'u8[4096]{0}', space=vmem, size = 0x1000, scoped, tag = 'input window, operand 0, single buffered']
    #allocation3 [shape = 's32[1]{0}', space=sflag, size = 0x4, scoped, tag = 'scoped memory for tpu_custom_call.1']
    #allocation4 [shape = 's32[1]{0}', space=sflag, size = 0x4, scoped, tag = 'scoped memory for tpu_custom_call.1']
    #allocation5 [shape = 'u8[4096]{0}', space=vmem, size = 0x1000, scoped, tag = 'input window, operand 1, single buffered']
    #allocation6 [shape = 's32[1]{0}', space=sflag, size = 0x4, scoped, tag = 'scoped memory for tpu_custom_call.1']
    #allocation7 [shape = 'u8[4096]{0}', space=vmem, size = 0x1000, scoped, tag = 'input window, operand 2, single buffered']
    #allocation8 [shape = 'u8[4096]{0}', space=vmem, size = 0x1000, scoped, tag = 'output window, operand 0, single buffered']
    %8 = vsyncpa [#allocation3], 0
    %9 = vsyncpa [#allocation6], 0
    %10 = vsyncpa [#allocation4], 0
    // Predicated region
    $region2: #{tpu_custom_call.1} parent=1 // pred_check
      _
    $region3: #{tpu_custom_call.1} parent=1 // pred_check_branch
      %12 = sbr.rel (0) target = $region5
    $region4: #{tpu_custom_call.1} parent=1 // pred_region
      %s13 = sadd.s32 0, 0
      %s15 = ssub.s32 128, 128
      %16 = vsyncadd [#allocation3], %s15
      %s17 = smul.addr %s13, 128
      %s18 = scalar_lea.hbm %s0, %s17
      %s20 = sshll.u32 [#allocation2], 4
      %s21 = int_to_ptr.vmem [resolvable:$true] %s20
      %23 = dma.hbm_to_vmem [thread:$0]  %s18, 128, %s21, [#allocation3]
    $region5: #{tpu_custom_call.1} parent=1 // pred_fallthru
      _
    // Predicated region
    $region6: #{tpu_custom_call.1} parent=1 // pred_check
      _
    $region7: #{tpu_custom_call.1} parent=1 // pred_check_branch
      %25 = sbr.rel (0) target = $region9
    $region8: #{tpu_custom_call.1} parent=1 // pred_region
      %s26 = sadd.s32 0, 0
      %s28 = ssub.s32 128, 128
      %29 = vsyncadd [#allocation6], %s28
      %s30 = smul.addr %s26, 128
      %s31 = scalar_lea.hbm %s1, %s30
      %s33 = sshll.u32 [#allocation5], 4
      %s34 = int_to_ptr.vmem [resolvable:$true] %s33
      %36 = dma.hbm_to_vmem [thread:$0]  %s31, 128, %s34, [#allocation6]
    $region9: #{tpu_custom_call.1} parent=1 // pred_fallthru
      _
    // Predicated region
    $region10: #{tpu_custom_call.1} parent=1 // pred_check
      _
    $region11: #{tpu_custom_call.1} parent=1 // pred_check_branch
      %38 = sbr.rel (0) target = $region13
    $region12: #{tpu_custom_call.1} parent=1 // pred_region
      %s39 = sadd.s32 0, 0
      %s41 = ssub.s32 128, 128
      %42 = vsyncadd [#allocation6], %s41
      %s43 = smul.addr %s39, 128
      %s44 = scalar_lea.hbm %s2, %s43
      %s46 = sshll.u32 [#allocation7], 4
      %s47 = int_to_ptr.vmem [resolvable:$true] %s46
      %49 = dma.hbm_to_vmem [thread:$0]  %s44, 128, %s47, [#allocation6]
    $region13: #{tpu_custom_call.1} parent=1 // pred_fallthru
      _
    // Predicated region
    $region14: #{tpu_custom_call.1} parent=1 // pred_check
      _
    $region15: #{tpu_custom_call.1} parent=1 // pred_check_branch
      %51 = sbr.rel (0) target = $region17
    $region16: #{tpu_custom_call.1} parent=1 // pred_region
      %52 = dma.done [#allocation3], 128
    $region17: #{tpu_custom_call.1} parent=1 // pred_fallthru
      _
    // Predicated region
    $region18: #{tpu_custom_call.1} parent=1 // pred_check
      _
    $region19: #{tpu_custom_call.1} parent=1 // pred_check_branch
      %54 = sbr.rel (0) target = $region21
    $region20: #{tpu_custom_call.1} parent=1 // pred_region
      %55 = dma.done [#allocation6], 128
    $region21: #{tpu_custom_call.1} parent=1 // pred_fallthru
      _
    // Predicated region
    $region22: #{tpu_custom_call.1} parent=1 // pred_check
      _
    $region23: #{tpu_custom_call.1} parent=1 // pred_check_branch
      %57 = sbr.rel (0) target = $region25
    $region24: #{tpu_custom_call.1} parent=1 // pred_region
      %58 = dma.done [#allocation6], 128
    $region25: #{tpu_custom_call.1} parent=1 // pred_fallthru
      _
    %s59 = sadd.s32 0, 0
    %s60 = sadd.s32 0, 0
    %s61 = sadd.s32 0, 0
    %p62 = scmp.eq.s32.totalorder 0, 0
    // Predicated region
    $region26: #{tpu_custom_call.1} parent=1 // pred_check
      %p63 = pneg %p62
    $region27: #{tpu_custom_call.1} parent=1 // pred_check_branch
      %65 = sbr.rel (%p63) target = $region29
    $region28: #{tpu_custom_call.1} parent=1 // pred_region
      %66 = vst [vmem:[#allocation8] sm:$0xff] 0.0
    $region29: #{tpu_custom_call.1} parent=1 // pred_fallthru
      _
    %v67 = vld [vmem:[#allocation2] sm:$0xff]
    %v68 = vld [vmem:[#allocation5] sm:$0xff]
    %v69 = vld [vmem:[#allocation7] sm:$0xff]
    %v70 = vsub.f32 %v68, %v67
    %v71 = vand.u32 2147483647, %v70
    %v72 = vand.u32 2147483647, %v69
    %v73 = vmax.f32 %v71, %v72
    %v74 = vmul.f32 %v69, 0.8
    %v75 = vsub.f32 %v73, %v74
    %v76 = vld [vmem:[#allocation8] sm:$0xff]
    %v77 = vadd.f32 %v75, 0.0
    %v78 = vadd.f32 %v76, %v77
    %79 = vst [vmem:[#allocation8] sm:$0xff] %v78
    // Predicated region
    $region30: #{tpu_custom_call.1} parent=1 // pred_check
      _
    $region31: #{tpu_custom_call.1} parent=1 // pred_check_branch
      %81 = sbr.rel (0) target = $region33
    $region32: #{tpu_custom_call.1} parent=1 // pred_region
      %s83 = ssub.s32 128, 128
      %84 = vsyncadd [#allocation4], %s83
      %s86 = sshll.u32 [#allocation8], 4
      %s87 = int_to_ptr.vmem [resolvable:$true] %s86
      %89 = dma.vmem_to_hbm [thread:$0]  %s87, 128, %s3, [#allocation4]
    $region33: #{tpu_custom_call.1} parent=1 // pred_fallthru
      _
    // Predicated region
    $region34: #{tpu_custom_call.1} parent=1 // pred_check
      _
    $region35: #{tpu_custom_call.1} parent=1 // pred_check_branch
      %91 = sbr.rel (0) target = $region37
    $region36: #{tpu_custom_call.1} parent=1 // pred_region
      %92 = dma.done [#allocation4], 128
    $region37: #{tpu_custom_call.1} parent=1 // pred_fallthru
      _
    %93 = vsyncpa [#allocation3], 1
    %94 = vsyncpa [#allocation6], 1
    %95 = vsyncpa [#allocation4], 1

</llo_original>
